<compile_context>
chip_gen: v7x
topology: tpu7x:2x2x1
jax: 0.10.0
libtpu: 0.0.40
codegen_flags: <defaults>
</compile_context>

<pallas_src>
import functools

import jax
import jax.numpy as jnp
from jax import lax
from jax.experimental import pallas as pl
from jax.experimental.pallas import tpu as pltpu

LANES = 128      # vreg lane width
SUBLANES = 8     # f32 vreg sublane count


def _tpu_defaults():
    """Per-generation (native block bytes, #TensorCores to split across)."""
    try:
        kind = jax.devices()[0].device_kind.lower()
    except Exception:
        kind = ""
    if "v7" in kind:            # 3.2 TB/s HBM, 2 TCs/chip, 64 MiB VMEM
        return 8 << 20, 2
    if "v6" in kind:            # 1.4 TB/s HBM, 1 TC, 128 MiB VMEM
        return 8 << 20, 1
    return 4 << 20, 1           # v5e & older / unknown: conservative


def _abs_sum_kernel(x_ref, acc_ref, *, tm, valid_rows, blocks_per_core, any_mask):
    """acc_ref (8,128) f32: per-(sublane,lane) partial sums of |x| for this core."""
    c = pl.program_id(0)            # core / stream index ("parallel")
    b = pl.program_id(1)            # block index within this stream ("arbitrary")

    @pl.when(b == 0)
    def _():
        acc_ref[...] = jnp.zeros_like(acc_ref)

    def accumulate(x):
        # (tm,128) -> (tm//8, 8, 128); reduce the leading dim with VPU adds only,
        # keeping 1024 parallel accumulators (no per-step cross-lane XLU reduce).
        acc_ref[...] += jnp.sum(x.reshape(tm // SUBLANES, SUBLANES, LANES), axis=0)

    if not any_mask:
        # Every block is fully valid: zero mask overhead on every step.
        accumulate(jnp.abs(x_ref[...]).astype(jnp.float32))
    else:
        logical_block = c * blocks_per_core + b
        block_start = logical_block * tm
        is_ragged = block_start + tm > valid_rows   # ragged last block / OOB-clamped

        @pl.when(jnp.logical_not(is_ragged))
        def _():
            accumulate(jnp.abs(x_ref[...]).astype(jnp.float32))

        @pl.when(is_ragged)
        def _():
            # Row-granular mask (the validity cut is row-aligned; the sub-128
            # lane tail is summed outside the kernel).
            row = block_start + lax.broadcasted_iota(jnp.int32, (tm, 1), 0)
            x = jnp.abs(x_ref[...]).astype(jnp.float32)
            accumulate(jnp.where(row < valid_rows, x, 0.0))


def masked_data_loss(residual, number_valid, *, block_bytes=None, num_cores=None):
    """Returns scalar f32: sum(abs(residual)) / number_valid."""
    flat = residual.reshape(-1)                  # native dtype; no f32 copy in HBM
    n = flat.shape[0]
    itemsize = jnp.dtype(flat.dtype).itemsize

    gen_block_bytes, gen_cores = _tpu_defaults()
    if block_bytes is None:
        block_bytes = gen_block_bytes
    if num_cores is None:
        num_cores = gen_cores

    # Sublane granularity of the second-minor dim: 8 (f32) / 16 (bf16) / 32 (i8).
    sub = max(SUBLANES, (4 // max(1, itemsize)) * SUBLANES)
    tm_max = max(sub, (block_bytes // (LANES * itemsize)) // sub * sub)

    rows_full = n // LANES
    tail_len = n - rows_full * LANES
    tail_sum = jnp.float32(0.0)

    if rows_full == 0:
        # Degenerate: fewer than 128 elements -> plain JAX.
        total = jnp.sum(jnp.abs(flat.astype(jnp.float32)))
        return total / jnp.asarray(number_valid, jnp.float32)

    if rows_full >= tm_max:
        # Large input: stream the 128-aligned prefix; the <=127-element tail is
        # summed in plain JAX (avoids jnp.pad's full extra HBM copy).
        # TODO(synk): a manual-DMA kernel over the raw 1-D HBM ref would avoid
        # even the prefix-slice copy for misaligned sizes.
        tm = tm_max
        if tail_len:
            tail_sum = jnp.sum(jnp.abs(flat[rows_full * LANES:].astype(jnp.float32)))
            flat = flat[: rows_full * LANES]
        rows = rows_full
    else:
        # Small input: one block covering the whole (tiny) slab; pad to a
        # sublane-tile multiple so the in-kernel (.., sub, 128) reshape is legal.
        num_cores = 1
        chunk = sub * LANES
        padded_n = pl.cdiv(n, chunk) * chunk
        if padded_n != n:
            flat = jnp.pad(flat, (0, padded_n - n))   # zero pad: abs(0) == 0
        rows = padded_n // LANES
        tm = rows

    x2d = flat.reshape(rows, LANES)
    num_blocks = pl.cdiv(rows, tm)
    if num_blocks < 2 * num_cores:        # not worth splitting across cores
        num_cores = 1
    blocks_per_core = pl.cdiv(num_blocks, num_cores)
    needs_clamp = (num_blocks % num_cores) != 0
    any_mask = (rows % tm != 0) or needs_clamp

    last_block = num_blocks - 1
    if needs_clamp:
        # OOB logical blocks of the last core re-read the last physical block;
        # the in-kernel mask zeroes their contribution.
        def in_map(c, b):
            return (jnp.minimum(c * blocks_per_core + b, last_block), 0)
    else:
        def in_map(c, b):
            return (c * blocks_per_core + b, 0)

    kernel = functools.partial(
        _abs_sum_kernel, tm=tm, valid_rows=rows,
        blocks_per_core=blocks_per_core, any_mask=any_mask)

    # Scoped-VMEM budget: double-buffered native input + (worst case) an f32
    # temp per buffered block + slack; capped well under v7x's 64 MiB physical.
    block_native = tm * LANES * itemsize
    block_f32 = tm * LANES * 4
    vmem_limit = int(min(48 << 20,
                         max(16 << 20, 2 * block_native + 2 * block_f32 + (2 << 20))))

    partials = pl.pallas_call(
        kernel,
        out_shape=jax.ShapeDtypeStruct((num_cores, SUBLANES, LANES), jnp.float32),
        grid=(num_cores, blocks_per_core),
        in_specs=[pl.BlockSpec((tm, LANES), in_map)],
        # Per-core resident accumulator block across the reduction axis.
        out_specs=pl.BlockSpec((None, SUBLANES, LANES), lambda c, b: (c, 0, 0)),
        compiler_params=pltpu.CompilerParams(
            dimension_semantics=("parallel", "arbitrary"),
            vmem_limit_bytes=vmem_limit),
    )(x2d)

    # Tiny final reduce (num_cores * 1024 floats) + tail + divide: plain JAX.
    total = jnp.sum(partials) + tail_sum
    return total / jnp.asarray(number_valid, jnp.float32)


if __name__ == "__main__":
    key = jax.random.PRNGKey(0)
    k1, k2, k3, k4 = jax.random.split(key, 4)

    # 1) Small NCHW residual (single-block path), f32.
    residual = jax.random.normal(k1, (2, 4, 16, 16), dtype=jnp.float32)
    number_valid = jnp.float32(residual.size)
    loss = jax.block_until_ready(masked_data_loss(residual, number_valid))
    ref = jnp.sum(jnp.abs(residual)) / number_valid
    assert jnp.allclose(loss, ref, rtol=1e-5, atol=1e-6), (loss, ref)

    # 2) Multi-block + forced 2-stream split with tiny blocks: exercises the
    #    per-core accumulators, the OOB block clamp, the pl.when-gated ragged
    #    mask, and the aligned-prefix + JAX-tail path (size not a 128 multiple).
    residual2 = jax.random.normal(k2, (2, 3, 28, 27), dtype=jnp.float32)
    number_valid2 = jnp.float32(4000.0)
    loss2 = jax.block_until_ready(
        masked_data_loss(residual2, number_valid2,
                         block_bytes=8 * 128 * 4, num_cores=2))
    ref2 = jnp.sum(jnp.abs(residual2)) / number_valid2
    assert jnp.allclose(loss2, ref2, rtol=1e-5, atol=1e-6), (loss2, ref2)

    # 3) bf16 with a non-128-multiple size: in-kernel packed abs before the f32
    #    upcast, ragged last block, tail summed outside.
    residual3 = jax.random.normal(k3, (3, 1000), dtype=jnp.bfloat16)
    number_valid3 = jnp.float32(residual3.size)
    loss3 = jax.block_until_ready(
        masked_data_loss(residual3, number_valid3, block_bytes=16 * 128 * 2))
    ref3 = jnp.sum(jnp.abs(residual3.astype(jnp.float32))) / number_valid3
    assert jnp.allclose(loss3, ref3, rtol=1e-4, atol=1e-5), (loss3, ref3)

    # 4) bf16 small aligned residual (single-block path with in-kernel upcast).
    residual4 = jax.random.normal(k4, (2, 4, 16, 16), dtype=jnp.bfloat16)
    number_valid4 = jnp.float32(residual4.size)
    loss4 = jax.block_until_ready(masked_data_loss(residual4, number_valid4))
    ref4 = jnp.sum(jnp.abs(residual4.astype(jnp.float32))) / number_valid4
    assert jnp.allclose(loss4, ref4, rtol=1e-4, atol=1e-5), (loss4, ref4)

    print("KERNEL_OK")
</pallas_src>

<mosaic_0001>
module attributes {stable_mosaic.version = 11 : i64} {
  func.func @_abs_sum_kernel(%arg0: i32, %arg1: i32, %arg2: memref<16x128xf32, #tpu.memory_space<vmem>>, %arg3: memref<1x8x128xf32, #tpu.memory_space<vmem>>) attributes {dimension_semantics = [#tpu.dimension_semantics<parallel>, #tpu.dimension_semantics<arbitrary>], iteration_bounds = array<i64: 1, 1>, scalar_prefetch = 0 : i64, scratch_operands = 0 : i64, tpu.core_type = #tpu.core_type<tc>, window_params = [{transform_indices = @transform_0, window_bounds = array<i64: 16, 128>}, {transform_indices = @transform_1, window_bounds = array<i64: 1, 8, 128>}]} {
    %c0_i32 = arith.constant 0 : i32
    %0 = arith.cmpi eq, %arg1, %c0_i32 : i32
    %1 = arith.extui %0 : i1 to i32
    %c0_i32_0 = arith.constant 0 : i32
    %2 = arith.cmpi ne, %1, %c0_i32_0 : i32
    scf.if %2 {
      %cst_8 = arith.constant 0.000000e+00 : f32
      %13 = vector.broadcast %cst_8 : f32 to vector<8x128xf32>
      %c0_9 = arith.constant 0 : index
      %c0_10 = arith.constant 0 : index
      %c0_11 = arith.constant 0 : index
      %14 = vector.load %arg3[%c0_9, %c0_10, %c0_11] : memref<1x8x128xf32, #tpu.memory_space<vmem>>, vector<1x8x128xf32>
      %15 = vector.shape_cast %14 : vector<1x8x128xf32> to vector<8x128xf32>
      %16 = vector.shape_cast %13 : vector<8x128xf32> to vector<1x8x128xf32>
      tpu.vector_store %arg3[%c0_9, %c0_10, %c0_11], %16 {strides = array<i32>} : memref<1x8x128xf32, #tpu.memory_space<vmem>>, vector<1x8x128xf32>,
    } else {
    }
    %c0 = arith.constant 0 : index
    %c0_1 = arith.constant 0 : index
    %3 = vector.load %arg2[%c0, %c0_1] : memref<16x128xf32, #tpu.memory_space<vmem>>, vector<16x128xf32>
    %4 = math.absf %3 : vector<16x128xf32>
    %c0_2 = arith.constant 0 : index
    %c0_3 = arith.constant 0 : index
    %c0_4 = arith.constant 0 : index
    %5 = vector.load %arg3[%c0_2, %c0_3, %c0_4] : memref<1x8x128xf32, #tpu.memory_space<vmem>>, vector<1x8x128xf32>
    %6 = vector.shape_cast %5 : vector<1x8x128xf32> to vector<8x128xf32>
    %7 = vector.shape_cast %4 : vector<16x128xf32> to vector<2x8x128xf32>
    %cst = arith.constant dense<0.000000e+00> : vector<8x128xf32>
    %8 = vector.multi_reduction <add>, %7, %cst [0] : vector<2x8x128xf32> to vector<8x128xf32>
    %9 = arith.addf %6, %8 : vector<8x128xf32>
    %c0_5 = arith.constant 0 : index
    %c0_6 = arith.constant 0 : index
    %c0_7 = arith.constant 0 : index
    %10 = vector.load %arg3[%c0_5, %c0_6, %c0_7] : memref<1x8x128xf32, #tpu.memory_space<vmem>>, vector<1x8x128xf32>
    %11 = vector.shape_cast %10 : vector<1x8x128xf32> to vector<8x128xf32>
    %12 = vector.shape_cast %9 : vector<8x128xf32> to vector<1x8x128xf32>
    tpu.vector_store %arg3[%c0_5, %c0_6, %c0_7], %12 {strides = array<i32>} : memref<1x8x128xf32, #tpu.memory_space<vmem>>, vector<1x8x128xf32>,
    return
  }
  func.func @transform_0(%arg0: i32, %arg1: i32) -> (i32, i32) {
    %c1_i32 = arith.constant 1 : i32
    %0 = arith.muli %arg0, %c1_i32 : i32
    %1 = arith.addi %0, %arg1 : i32
    %c0_i32 = arith.constant 0 : i32
    %c0_i32_0 = arith.constant 0 : i32
    return %1, %c0_i32 : i32, i32
  }
  func.func @transform_1(%arg0: i32, %arg1: i32) -> (i32, i32, i32) {
    %c0_i32 = arith.constant 0 : i32
    %c0_i32_0 = arith.constant 0 : i32
    %c0_i32_1 = arith.constant 0 : i32
    return %arg0, %c0_i32, %c0_i32_0 : i32, i32, i32
  }
}

</mosaic_0001>

<llo_original>
// kernel: tpu_custom_call.1
$region0: #{tpu_custom_call.1}
  #allocation0 [shape = 'u32[]', space=smem, size = 0x4, offset = 0x4, fixed_abs, tag = 'smem constant byte address 0x4 - core index']
  #allocation1 [shape = 'u32[144,128]{1,0:T(1,128)}', space=vmem, size = 0x12000, scoped, tag = 'internal scratch']
  %s0 = inlined_call_operand.hbm [shape: f32[16,128], index: 0, kind: input, shape index: {}]
  %s1 = inlined_call_operand.hbm [shape: f32[1,8,128], index: 1, kind: output, shape index: {}]
  %s2 = sld [smem:[#allocation0]]
  $region22: #{tpu_custom_call.1} parent=0
    _
  %s4 = ssub.s32 1, %s2
  %s5 = scalar_select 0, %s4, %s2
  $region1: #{tpu_custom_call.1} parent=0
    #allocation2 [shape = 'u8[8192]{0}', space=vmem, size = 0x2000, scoped, tag = 'input window, operand 0, single buffered']
    #allocation3 [shape = 's32[1]{0}', space=sflag, size = 0x4, scoped, tag = 'scoped memory for tpu_custom_call.1']
    #allocation4 [shape = 's32[1]{0}', space=sflag, size = 0x4, scoped, tag = 'scoped memory for tpu_custom_call.1']
    #allocation5 [shape = 'u8[4096]{0}', space=vmem, size = 0x1000, scoped, tag = 'output window, operand 0, single buffered']
    %6 = vsyncpa [#allocation3], 0
    %7 = vsyncpa [#allocation4], 0
    // Predicated region
    $region2: #{tpu_custom_call.1} parent=1 // pred_check
      _
    $region3: #{tpu_custom_call.1} parent=1 // pred_check_branch
      %9 = sbr.rel (0) target = $region5
    $region4: #{tpu_custom_call.1} parent=1 // pred_region
      %s10 = sadd.s32 0, 0
      %s11 = smul.u32 2, %s10
      %s13 = ssub.s32 256, 256
      %14 = vsyncadd [#allocation3], %s13
      %s15 = smul.addr %s11, 128
      %s16 = scalar_lea.hbm %s0, %s15
      %s17 = sshll.u32 [#allocation2], 4
      %s18 = int_to_ptr.vmem [resolvable:$true] %s17
      %23 = dma.hbm_to_vmem [thread:$0]  %s16, 256, %s18, [#allocation3], 128, 128, 8
    $region5: #{tpu_custom_call.1} parent=1 // pred_fallthru
      _
    // Predicated region
    $region6: #{tpu_custom_call.1} parent=1 // pred_check
      _
    $region7: #{tpu_custom_call.1} parent=1 // pred_check_branch
      %25 = sbr.rel (0) target = $region9
    $region8: #{tpu_custom_call.1} parent=1 // pred_region
      %26 = dma.done [#allocation3], 256
    $region9: #{tpu_custom_call.1} parent=1 // pred_fallthru
      _
    %s27 = sadd.s32 0, 0
    %s28 = smul.u32 2, %s27
    %p29 = scmp.eq.s32.totalorder 0, 0
    // Predicated region
    $region10: #{tpu_custom_call.1} parent=1 // pred_check
      %p30 = pneg %p29
    $region11: #{tpu_custom_call.1} parent=1 // pred_check_branch
      %32 = sbr.rel (%p30) target = $region13
    $region12: #{tpu_custom_call.1} parent=1 // pred_region
      %33 = vst [vmem:[#allocation5] sm:$0xff] 0.0
    $region13: #{tpu_custom_call.1} parent=1 // pred_fallthru
      _
    %v34 = vld [vmem:[#allocation2] sm:$0xff]
    %v35 = vld [vmem:[#allocation2 + $0x8] sm:$0xff]
    %v36 = vand.u32 2147483647, %v34
    %v37 = vand.u32 2147483647, %v35
    %v38 = vld [vmem:[#allocation5] sm:$0xff]
    %v39 = vadd.f32 %v36, %v37
    %v40 = vadd.f32 %v38, %v39
    %41 = vst [vmem:[#allocation5] sm:$0xff] %v40
    // Predicated region
    $region14: #{tpu_custom_call.1} parent=1 // pred_check
      _
    $region15: #{tpu_custom_call.1} parent=1 // pred_check_branch
      %43 = sbr.rel (0) target = $region17
    $region16: #{tpu_custom_call.1} parent=1 // pred_region
      %s45 = ssub.s32 128, 128
      %46 = vsyncadd [#allocation4], %s45
      %s48 = sshll.u32 [#allocation5], 4
      %s49 = int_to_ptr.vmem [resolvable:$true] %s48
      %51 = dma.vmem_to_hbm [thread:$0]  %s49, 128, %s1, [#allocation4]
    $region17: #{tpu_custom_call.1} parent=1 // pred_fallthru
      _
    // Predicated region
    $region18: #{tpu_custom_call.1} parent=1 // pred_check
      _
    $region19: #{tpu_custom_call.1} parent=1 // pred_check_branch
      %53 = sbr.rel (0) target = $region21
    $region20: #{tpu_custom_call.1} parent=1 // pred_region
      %54 = dma.done [#allocation4], 128
    $region21: #{tpu_custom_call.1} parent=1 // pred_fallthru
      _
    %55 = vsyncpa [#allocation3], 1
    %56 = vsyncpa [#allocation4], 1

</llo_original>
